<compile_context>
chip_gen: v7x
topology: tpu7x:2x2x1
jax: 0.10.0
libtpu: 0.0.40
codegen_flags: <defaults>
</compile_context>

<pallas_src>
import functools
import math

import numpy as np
import jax
import jax.numpy as jnp
from jax import lax
from jax.experimental import pallas as pl
from jax.experimental.pallas import tpu as pltpu

# Hyper-parameters implied by the module (kept small, deterministic).
EMBEDDING_DIMENSION = 32   # C
HEAD_SIZE = 16             # H
CONTEXT_SIZE = 8           # T  (tril is T x T, so seq len == CONTEXT_SIZE)
BATCH = 2                  # B


def _head_kernel(x_ref, wq_ref, wk_ref, wv_ref, mask_ref, o_ref):
    """Single invocation: whole problem resident in VMEM.

    x_ref    : (B*T, C)   VMEM  -- flattened batch*sequence rows
    wq_ref   : (C, H)     VMEM
    wk_ref   : (C, H)     VMEM
    wv_ref   : (C, H)     VMEM
    mask_ref : (B*T, B*T) VMEM  -- additive block-diagonal causal mask (0 / -1e30)
    o_ref    : (B*T, H)   VMEM
    """
    x = x_ref[...]                                                     # (N, C)

    # Three independent projection matmuls (MXU).  Separate dots avoid the
    # non-lane-aligned slices that a fused (C, 3H) weight would require.
    q = jnp.dot(x, wq_ref[...], preferred_element_type=jnp.float32)   # (N, H)
    k = jnp.dot(x, wk_ref[...], preferred_element_type=jnp.float32)   # (N, H)
    v = jnp.dot(x, wv_ref[...], preferred_element_type=jnp.float32)   # (N, H)

    # Scaled scores: contract over H directly (no k.T materialization).
    scale = jnp.float32(HEAD_SIZE ** -0.5)
    scores = lax.dot_general(
        q, k,
        dimension_numbers=(((1,), (1,)), ((), ())),
        preferred_element_type=jnp.float32) * scale                    # (N, N)

    # Precomputed additive block-diagonal causal mask (built once, host-side).
    scores = scores + mask_ref[...]

    # Numerically stable softmax.  Reciprocal goes to the EUP slot (approx)
    # + one Newton step for full f32 accuracy; no VPU vector divide.
    m = jnp.max(scores, axis=-1, keepdims=True)
    p = jnp.exp(scores - m)
    denom = jnp.sum(p, axis=-1, keepdims=True)
    inv = pl.reciprocal(denom, approx=True)
    inv = inv * (2.0 - denom * inv)          # Newton refinement
    wei = p * inv                            # (N, N)

    # Weighted sum of values.
    o_ref[...] = jnp.dot(wei, v,
                         preferred_element_type=jnp.float32).astype(o_ref.dtype)


@functools.lru_cache(maxsize=None)
def _block_causal_mask(batch: int, seq: int):
    """Additive (0 / -1e30) block-diagonal causal mask, built once per shape."""
    n = batch * seq
    i = np.arange(n)[:, None]
    j = np.arange(n)[None, :]
    valid = (i // seq == j // seq) & (j <= i)
    return jnp.asarray(np.where(valid, 0.0, -1e30).astype(np.float32))


@jax.jit
def _head_call(x, wq, wk, wv, mask):
    B, T, C = x.shape
    H = wq.shape[1]
    N = B * T
    x2d = x.reshape(N, C)

    vmem = pltpu.MemorySpace.VMEM
    out2d = pl.pallas_call(
        _head_kernel,
        out_shape=jax.ShapeDtypeStruct((N, H), jnp.float32),
        in_specs=[
            pl.BlockSpec(memory_space=vmem),   # x
            pl.BlockSpec(memory_space=vmem),   # wq
            pl.BlockSpec(memory_space=vmem),   # wk
            pl.BlockSpec(memory_space=vmem),   # wv
            pl.BlockSpec(memory_space=vmem),   # mask
        ],
        out_specs=pl.BlockSpec(memory_space=vmem),
    )(x2d, wq, wk, wv, mask)

    return out2d.reshape(B, T, H)


def head_forward(x, wq, wk, wv):
    """x: (B, T, C) f32; wq/wk/wv: (C, H) f32  ->  (B, T, H) f32."""
    B, T, C = x.shape
    H = wq.shape[1]
    assert T == CONTEXT_SIZE and C == EMBEDDING_DIMENSION and H == HEAD_SIZE
    mask = _block_causal_mask(B, T)            # cached: built once per shape
    return _head_call(x, wq, wk, wv, mask)


def _reference(x, wq, wk, wv):
    """Pure-JAX reference mirroring the PyTorch forward."""
    q = x @ wq
    k = x @ wk
    v = x @ wv
    wei = (q @ jnp.swapaxes(k, -2, -1)) * (HEAD_SIZE ** -0.5)
    tril = jnp.tril(jnp.ones((CONTEXT_SIZE, CONTEXT_SIZE)))
    wei = jnp.where(tril == 0, -jnp.inf, wei)
    wei = jax.nn.softmax(wei, axis=-1)
    return wei @ v


if __name__ == "__main__":
    key = jax.random.PRNGKey(0)
    kx, kq, kk, kv = jax.random.split(key, 4)

    x = jax.random.normal(kx, (BATCH, CONTEXT_SIZE, EMBEDDING_DIMENSION),
                          dtype=jnp.float32)

    # Deterministic parameter init (uniform(-1/sqrt(C), 1/sqrt(C)) like PyTorch
    # Linear default), stored as (C, H) so y = x @ W (== x @ W_pt.T).
    bound = 1.0 / math.sqrt(EMBEDDING_DIMENSION)
    wq = jax.random.uniform(kq, (EMBEDDING_DIMENSION, HEAD_SIZE),
                            minval=-bound, maxval=bound, dtype=jnp.float32)
    wk = jax.random.uniform(kk, (EMBEDDING_DIMENSION, HEAD_SIZE),
                            minval=-bound, maxval=bound, dtype=jnp.float32)
    wv = jax.random.uniform(kv, (EMBEDDING_DIMENSION, HEAD_SIZE),
                            minval=-bound, maxval=bound, dtype=jnp.float32)

    out = head_forward(x, wq, wk, wv)
    jax.block_until_ready(out)

    ref = _reference(x, wq, wk, wv)
    assert out.shape == (BATCH, CONTEXT_SIZE, HEAD_SIZE)
    assert jnp.allclose(out, ref, atol=1e-5, rtol=1e-5), "mismatch vs reference"

    print("KERNEL_OK")
</pallas_src>

<mosaic_0001>
module attributes {stable_mosaic.version = 11 : i64} {
  func.func @_head_kernel(%arg0: memref<16x32xf32, #tpu.memory_space<vmem>>, %arg1: memref<32x16xf32, #tpu.memory_space<vmem>>, %arg2: memref<32x16xf32, #tpu.memory_space<vmem>>, %arg3: memref<32x16xf32, #tpu.memory_space<vmem>>, %arg4: memref<16x16xf32, #tpu.memory_space<vmem>>, %arg5: memref<16x16xf32, #tpu.memory_space<vmem>>) attributes {dimension_semantics = [], scalar_prefetch = 0 : i64, scratch_operands = 0 : i64, tpu.core_type = #tpu.core_type<tc>} {
    %c0 = arith.constant 0 : index
    %c0_0 = arith.constant 0 : index
    %0 = vector.load %arg0[%c0, %c0_0] : memref<16x32xf32, #tpu.memory_space<vmem>>, vector<16x32xf32>
    %c0_1 = arith.constant 0 : index
    %c0_2 = arith.constant 0 : index
    %1 = vector.load %arg1[%c0_1, %c0_2] : memref<32x16xf32, #tpu.memory_space<vmem>>, vector<32x16xf32>
    %cst = arith.constant dense<0.000000e+00> : vector<16x16xf32>
    %2 = tpu.matmul %0, %1, %cst {dimension_numbers = #tpu.dot_dimension_numbers<[1], [0], [0], [1], [0, 0, 1, 1], [], []>} : vector<16x32xf32>, vector<32x16xf32>, vector<16x16xf32> -> vector<16x16xf32>
    %c0_3 = arith.constant 0 : index
    %c0_4 = arith.constant 0 : index
    %3 = vector.load %arg2[%c0_3, %c0_4] : memref<32x16xf32, #tpu.memory_space<vmem>>, vector<32x16xf32>
    %cst_5 = arith.constant dense<0.000000e+00> : vector<16x16xf32>
    %4 = tpu.matmul %0, %3, %cst_5 {dimension_numbers = #tpu.dot_dimension_numbers<[1], [0], [0], [1], [0, 0, 1, 1], [], []>} : vector<16x32xf32>, vector<32x16xf32>, vector<16x16xf32> -> vector<16x16xf32>
    %c0_6 = arith.constant 0 : index
    %c0_7 = arith.constant 0 : index
    %5 = vector.load %arg3[%c0_6, %c0_7] : memref<32x16xf32, #tpu.memory_space<vmem>>, vector<32x16xf32>
    %cst_8 = arith.constant dense<0.000000e+00> : vector<16x16xf32>
    %6 = tpu.matmul %0, %5, %cst_8 {dimension_numbers = #tpu.dot_dimension_numbers<[1], [0], [0], [1], [0, 0, 1, 1], [], []>} : vector<16x32xf32>, vector<32x16xf32>, vector<16x16xf32> -> vector<16x16xf32>
    %cst_9 = arith.constant dense<0.000000e+00> : vector<16x16xf32>
    %7 = tpu.matmul %2, %4, %cst_9 {dimension_numbers = #tpu.dot_dimension_numbers<[1], [1], [0], [0], [0, 0, 1, 0], [], []>} : vector<16x16xf32>, vector<16x16xf32>, vector<16x16xf32> -> vector<16x16xf32>
    %cst_10 = arith.constant 2.500000e-01 : f32
    %8 = vector.broadcast %cst_10 : f32 to vector<16x16xf32>
    %9 = arith.mulf %7, %8 : vector<16x16xf32>
    %c0_11 = arith.constant 0 : index
    %c0_12 = arith.constant 0 : index
    %10 = vector.load %arg4[%c0_11, %c0_12] : memref<16x16xf32, #tpu.memory_space<vmem>>, vector<16x16xf32>
    %11 = arith.addf %9, %10 : vector<16x16xf32>
    %cst_13 = arith.constant dense<0xFF800000> : vector<16xf32>
    %12 = vector.multi_reduction <maximumf>, %11, %cst_13 [1] : vector<16x16xf32> to vector<16xf32>
    %13 = vector.shape_cast %12 : vector<16xf32> to vector<16x1xf32>
    %14 = vector.broadcast %13 : vector<16x1xf32> to vector<16x16xf32>
    %15 = arith.subf %11, %14 : vector<16x16xf32>
    %16 = math.exp %15 : vector<16x16xf32>
    %cst_14 = arith.constant dense<0.000000e+00> : vector<16xf32>
    %17 = vector.multi_reduction <add>, %16, %cst_14 [1] : vector<16x16xf32> to vector<16xf32>
    %18 = vector.shape_cast %17 : vector<16xf32> to vector<16x1xf32>
    %19 = tpu.reciprocal %18 {approx = true} : vector<16x1xf32> -> vector<16x1xf32>
    %20 = arith.mulf %18, %19 : vector<16x1xf32>
    %cst_15 = arith.constant 2.000000e+00 : f32
    %21 = vector.broadcast %cst_15 : f32 to vector<16x1xf32>
    %22 = arith.subf %21, %20 : vector<16x1xf32>
    %23 = arith.mulf %19, %22 : vector<16x1xf32>
    %24 = vector.broadcast %23 : vector<16x1xf32> to vector<16x16xf32>
    %25 = arith.mulf %16, %24 : vector<16x16xf32>
    %cst_16 = arith.constant dense<0.000000e+00> : vector<16x16xf32>
    %26 = tpu.matmul %25, %6, %cst_16 {dimension_numbers = #tpu.dot_dimension_numbers<[1], [0], [0], [1], [0, 0, 1, 1], [], []>} : vector<16x16xf32>, vector<16x16xf32>, vector<16x16xf32> -> vector<16x16xf32>
    %c0_17 = arith.constant 0 : index
    %c0_18 = arith.constant 0 : index
    %27 = vector.load %arg5[%c0_17, %c0_18] : memref<16x16xf32, #tpu.memory_space<vmem>>, vector<16x16xf32>
    tpu.vector_store %arg5[%c0_17, %c0_18], %26 {strides = array<i32>} : memref<16x16xf32, #tpu.memory_space<vmem>>, vector<16x16xf32>,
    return
  }
}

</mosaic_0001>

<llo_original>
// kernel: _head_call.1
$region0: #{_head_call.1}
  #allocation0 [shape = 'u32[]', space=smem, size = 0x4, offset = 0x4, fixed_abs, tag = 'smem constant byte address 0x4 - core index']
  #allocation1 [shape = 'u32[144,128]{1,0:T(1,128)}', space=vmem, size = 0x12000, scoped, tag = 'internal scratch']
  %s0 = inlined_call_operand.vmem [shape: f32[16,32], index: 0, kind: input, shape index: {}]
  %s1 = inlined_call_operand.vmem [shape: f32[32,16], index: 1, kind: input, shape index: {}]
  %s2 = inlined_call_operand.vmem [shape: f32[32,16], index: 2, kind: input, shape index: {}]
  %s3 = inlined_call_operand.vmem [shape: f32[32,16], index: 3, kind: input, shape index: {}]
  %s4 = inlined_call_operand.vmem [shape: f32[16,16], index: 4, kind: input, shape index: {}]
  %s5 = inlined_call_operand.hbm [shape: f32[16,16], index: 5, kind: output, shape index: {}]
  %s6 = sld [smem:[#allocation0]]
  $region30: #{_head_call.1} parent=0
    _
  %s8 = ssub.s32 1, %s6
  %s9 = scalar_select 0, %s8, %s6
  $region1: #{_head_call.1} parent=0
    #allocation2 [shape = 'u8[8192]{0}', space=vmem, size = 0x2000, scoped, tag = 'output window, operand 0, single buffered']
    #allocation3 [shape = 's32[1]{0}', space=sflag, size = 0x4, scoped, tag = 'scoped memory for _head_call.1']
    %10 = vsyncpa [#allocation3], 0
    // Predicated region
    $region2: #{_head_call.1} parent=1 // pred_check
      _
    $region3: #{_head_call.1} parent=1 // pred_check_branch
      %12 = sbr.rel (0) target = $region5
    $region4: #{_head_call.1} parent=1 // pred_region
      _
    $region5: #{_head_call.1} parent=1 // pred_fallthru
      _
    // Predicated region
    $region6: #{_head_call.1} parent=1 // pred_check
      _
    $region7: #{_head_call.1} parent=1 // pred_check_branch
      %14 = sbr.rel (0) target = $region9
    $region8: #{_head_call.1} parent=1 // pred_region
      _
    $region9: #{_head_call.1} parent=1 // pred_fallthru
      _
    // Predicated region
    $region10: #{_head_call.1} parent=1 // pred_check
      _
    $region11: #{_head_call.1} parent=1 // pred_check_branch
      %16 = sbr.rel (0) target = $region13
    $region12: #{_head_call.1} parent=1 // pred_region
      _
    $region13: #{_head_call.1} parent=1 // pred_fallthru
      _
    // Predicated region
    $region14: #{_head_call.1} parent=1 // pred_check
      _
    $region15: #{_head_call.1} parent=1 // pred_check_branch
      %18 = sbr.rel (0) target = $region17
    $region16: #{_head_call.1} parent=1 // pred_region
      _
    $region17: #{_head_call.1} parent=1 // pred_fallthru
      _
    // Predicated region
    $region18: #{_head_call.1} parent=1 // pred_check
      _
    $region19: #{_head_call.1} parent=1 // pred_check_branch
      %20 = sbr.rel (0) target = $region21
    $region20: #{_head_call.1} parent=1 // pred_region
      _
    $region21: #{_head_call.1} parent=1 // pred_fallthru
      _
    %v21 = vld [vmem:[%s0] sm:$0xff]
    %v22 = vld [vmem:[%s0 + $0x8] sm:$0xff]
    %v23 = vld [vmem:[%s1] sm:$0xff]
    %v24 = vld [vmem:[%s1 + $0x8] sm:$0xff]
    %v25 = vld [vmem:[%s1 + $0x10] sm:$0xff]
    %v26 = vld [vmem:[%s1 + $0x18] sm:$0xff]
    %vm27 = vcmask 261120
    %v29 = vsel %vm27, %v21, 0
    %v32 = vsel %vm27, %v22, 0
    %34 = vmatprep.subr.mxu0 0.0
    %35 = vmatpush1.msra.mxu0 %v23
    %36 = vmatprep.subr.mxu0 0.0
    %37 = vmatpush1.msra.mxu0 %v24
    %38 = vmatprep.subr.mxu0 0.0
    %39 = vmatpush1.msra.mxu0 %v25
    %40 = vmatprep.subr.mxu0 0.0
    %41 = vmatpush1.msra.mxu0 %v26
    %42 = vmatprep.subr.mxu0 0.0
    %43 = vmatpush1.msra.mxu0 0.0
    %44 = vmatprep.subr.mxu0 0.0
    %45 = vmatpush1.msra.mxu0 0.0
    %46 = vmatprep.subr.mxu0 0.0
    %47 = vmatpush1.msra.mxu0 0.0
    %48 = vmatprep.subr.mxu0 0.0
    %49 = vmatpush1.msra.mxu0 0.0
    %50 = vmatprep.subr.mxu0 0.0
    %51 = vmatpush1.msra.mxu0 0.0
    %52 = vmatprep.subr.mxu0 0.0
    %53 = vmatpush1.msra.mxu0 0.0
    %54 = vmatprep.subr.mxu0 0.0
    %55 = vmatpush1.msra.mxu0 0.0
    %56 = vmatprep.subr.mxu0 0.0
    %57 = vmatpush1.msra.mxu0 0.0
    %58 = vmatprep.subr.mxu0 0.0
    %59 = vmatpush1.msra.mxu0 0.0
    %60 = vmatprep.subr.mxu0 0.0
    %61 = vmatpush1.msra.mxu0 0.0
    %62 = vmatprep.subr.mxu0 0.0
    %63 = vmatpush1.msra.mxu0 0.0
    %64 = vmatprep.subr.mxu0 0.0
    %65 = vmatpush1.msra.mxu0 0.0
    %66 = vmatprep.subr.mxu0 0.0
    %67 = vmatpush1.msra.mxu0 0.0
    %68 = vmatprep.subr.mxu0 0.0
    %69 = vmatpush1.msra.mxu0 0.0
    %70 = vmatprep.subr.mxu0 0.0
    %71 = vmatpush1.msra.mxu0 0.0
    %72 = vmatprep.subr.mxu0 0.0
    %73 = vmatpush1.msra.mxu0 0.0
    %74 = vmatprep.subr.mxu0 0.0
    %75 = vmatpush1.msra.mxu0 0.0
    %76 = vmatprep.subr.mxu0 0.0
    %77 = vmatpush1.msra.mxu0 0.0
    %78 = vmatprep.subr.mxu0 0.0
    %79 = vmatpush1.msra.mxu0 0.0
    %80 = vmatprep.subr.mxu0 0.0
    %81 = vmatpush1.msra.mxu0 0.0
    %82 = vmatprep.subr.mxu0 0.0
    %83 = vmatpush1.msra.mxu0 0.0
    %84 = vmatprep.subr.mxu0 0.0
    %85 = vmatpush1.msra.mxu0 0.0
    %86 = vmatprep.subr.mxu0 0.0
    %87 = vmatpush1.msra.mxu0 0.0
    %88 = vmatprep.subr.mxu0 0.0
    %89 = vmatpush1.msra.mxu0 0.0
    %90 = vmatprep.subr.mxu0 0.0
    %91 = vmatpush1.msra.mxu0 0.0
    %92 = vmatprep.subr.mxu0 0.0
    %93 = vmatpush1.msra.mxu0 0.0
    %94 = vmatprep.subr.mxu0 0.0
    %95 = vmatpush1.msra.mxu0 0.0
    %96 = vmatprep.subr.mxu0 0.0
    %97 = vmatpush1.msra.mxu0 0.0
    %98 = vmatprep.mubr.f32.mxu0 0.0
    %99 = vmatmul.mubr.f32.gmra.mrb[0].mxu0 %v29
    %v100 = vpop.f32.mrb[0].mxu0
    %v101 = vadd.f32 0.0, %v100
    %v102 = vpop.f32.mrb[0].mxu0
    %103 = vmatprep.mubr.f32.mxu0 0.0
    %104 = vmatmul.mubr.f32.gmra.mrb[0].mxu0 %v32
    %v105 = vpop.f32.mrb[0].mxu0
    %v106 = vadd.f32 0.0, %v105
    %v107 = vpop.f32.mrb[0].mxu0
    %108 = vdwg.mxu0
    %v109 = vld [vmem:[%s2] sm:$0xff]
    %v110 = vld [vmem:[%s2 + $0x8] sm:$0xff]
    %v111 = vld [vmem:[%s2 + $0x10] sm:$0xff]
    %v112 = vld [vmem:[%s2 + $0x18] sm:$0xff]
    %113 = vmatprep.subr.mxu0 0.0
    %114 = vmatpush1.msra.mxu0 %v109
    %115 = vmatprep.subr.mxu0 0.0
    %116 = vmatpush1.msra.mxu0 %v110
    %117 = vmatprep.subr.mxu0 0.0
    %118 = vmatpush1.msra.mxu0 %v111
    %119 = vmatprep.subr.mxu0 0.0
    %120 = vmatpush1.msra.mxu0 %v112
    %121 = vmatprep.subr.mxu0 0.0
    %122 = vmatpush1.msra.mxu0 0.0
    %123 = vmatprep.subr.mxu0 0.0
    %124 = vmatpush1.msra.mxu0 0.0
    %125 = vmatprep.subr.mxu0 0.0
    %126 = vmatpush1.msra.mxu0 0.0
    %127 = vmatprep.subr.mxu0 0.0
    %128 = vmatpush1.msra.mxu0 0.0
    %129 = vmatprep.subr.mxu0 0.0
    %130 = vmatpush1.msra.mxu0 0.0
    %131 = vmatprep.subr.mxu0 0.0
    %132 = vmatpush1.msra.mxu0 0.0
    %133 = vmatprep.subr.mxu0 0.0
    %134 = vmatpush1.msra.mxu0 0.0
    %135 = vmatprep.subr.mxu0 0.0
    %136 = vmatpush1.msra.mxu0 0.0
    %137 = vmatprep.subr.mxu0 0.0
    %138 = vmatpush1.msra.mxu0 0.0
    %139 = vmatprep.subr.mxu0 0.0
    %140 = vmatpush1.msra.mxu0 0.0
    %141 = vmatprep.subr.mxu0 0.0
    %142 = vmatpush1.msra.mxu0 0.0
    %143 = vmatprep.subr.mxu0 0.0
    %144 = vmatpush1.msra.mxu0 0.0
    %145 = vmatprep.subr.mxu0 0.0
    %146 = vmatpush1.msra.mxu0 0.0
    %147 = vmatprep.subr.mxu0 0.0
    %148 = vmatpush1.msra.mxu0 0.0
    %149 = vmatprep.subr.mxu0 0.0
    %150 = vmatpush1.msra.mxu0 0.0
    %151 = vmatprep.subr.mxu0 0.0
    %152 = vmatpush1.msra.mxu0 0.0
    %153 = vmatprep.subr.mxu0 0.0
    %154 = vmatpush1.msra.mxu0 0.0
    %155 = vmatprep.subr.mxu0 0.0
    %156 = vmatpush1.msra.mxu0 0.0
    %157 = vmatprep.subr.mxu0 0.0
    %158 = vmatpush1.msra.mxu0 0.0
    %159 = vmatprep.subr.mxu0 0.0
    %160 = vmatpush1.msra.mxu0 0.0
    %161 = vmatprep.subr.mxu0 0.0
    %162 = vmatpush1.msra.mxu0 0.0
    %163 = vmatprep.subr.mxu0 0.0
    %164 = vmatpush1.msra.mxu0 0.0
    %165 = vmatprep.subr.mxu0 0.0
    %166 = vmatpush1.msra.mxu0 0.0
    %167 = vmatprep.subr.mxu0 0.0
    %168 = vmatpush1.msra.mxu0 0.0
    %169 = vmatprep.subr.mxu0 0.0
    %170 = vmatpush1.msra.mxu0 0.0
    %171 = vmatprep.subr.mxu0 0.0
    %172 = vmatpush1.msra.mxu0 0.0
    %173 = vmatprep.subr.mxu0 0.0
    %174 = vmatpush1.msra.mxu0 0.0
    %175 = vmatprep.subr.mxu0 0.0
    %176 = vmatpush1.msra.mxu0 0.0
    %177 = vmatprep.mubr.f32.mxu0 0.0
    %178 = vmatmul.mubr.f32.gmra.mrb[0].mxu0 %v29
    %v179 = vpop.f32.mrb[0].mxu0
    %v180 = vadd.f32 0.0, %v179
    %v181 = vpop.f32.mrb[0].mxu0
    %182 = vmatprep.mubr.f32.mxu0 0.0
    %183 = vmatmul.mubr.f32.gmra.mrb[0].mxu0 %v32
    %v184 = vpop.f32.mrb[0].mxu0
    %v185 = vadd.f32 0.0, %v184
    %v186 = vpop.f32.mrb[0].mxu0
    %187 = vdwg.mxu0
    %v188 = vld [vmem:[%s3] sm:$0xff]
    %v189 = vld [vmem:[%s3 + $0x8] sm:$0xff]
    %v190 = vld [vmem:[%s3 + $0x10] sm:$0xff]
    %v191 = vld [vmem:[%s3 + $0x18] sm:$0xff]
    %192 = vmatprep.subr.mxu0 0.0
    %193 = vmatpush1.msra.mxu0 %v188
    %194 = vmatprep.subr.mxu0 0.0
    %195 = vmatpush1.msra.mxu0 %v189
    %196 = vmatprep.subr.mxu0 0.0
    %197 = vmatpush1.msra.mxu0 %v190
    %198 = vmatprep.subr.mxu0 0.0
    %199 = vmatpush1.msra.mxu0 %v191
    %200 = vmatprep.subr.mxu0 0.0
    %201 = vmatpush1.msra.mxu0 0.0
    %202 = vmatprep.subr.mxu0 0.0
    %203 = vmatpush1.msra.mxu0 0.0
    %204 = vmatprep.subr.mxu0 0.0
    %205 = vmatpush1.msra.mxu0 0.0
    %206 = vmatprep.subr.mxu0 0.0
    %207 = vmatpush1.msra.mxu0 0.0
    %208 = vmatprep.subr.mxu0 0.0
    %209 = vmatpush1.msra.mxu0 0.0
    %210 = vmatprep.subr.mxu0 0.0
    %211 = vmatpush1.msra.mxu0 0.0
    %212 = vmatprep.subr.mxu0 0.0
    %213 = vmatpush1.msra.mxu0 0.0
    %214 = vmatprep.subr.mxu0 0.0
    %215 = vmatpush1.msra.mxu0 0.0
    %216 = vmatprep.subr.mxu0 0.0
    %217 = vmatpush1.msra.mxu0 0.0
    %218 = vmatprep.subr.mxu0 0.0
    %219 = vmatpush1.msra.mxu0 0.0
    %220 = vmatprep.subr.mxu0 0.0
    %221 = vmatpush1.msra.mxu0 0.0
    %222 = vmatprep.subr.mxu0 0.0
    %223 = vmatpush1.msra.mxu0 0.0
    %224 = vmatprep.subr.mxu0 0.0
    %225 = vmatpush1.msra.mxu0 0.0
    %226 = vmatprep.subr.mxu0 0.0
    %227 = vmatpush1.msra.mxu0 0.0
    %228 = vmatprep.subr.mxu0 0.0
    %229 = vmatpush1.msra.mxu0 0.0
    %230 = vmatprep.subr.mxu0 0.0
    %231 = vmatpush1.msra.mxu0 0.0
    %232 = vmatprep.subr.mxu0 0.0
    %233 = vmatpush1.msra.mxu0 0.0
    %234 = vmatprep.subr.mxu0 0.0
    %235 = vmatpush1.msra.mxu0 0.0
    %236 = vmatprep.subr.mxu0 0.0
    %237 = vmatpush1.msra.mxu0 0.0
    %238 = vmatprep.subr.mxu0 0.0
    %239 = vmatpush1.msra.mxu0 0.0
    %240 = vmatprep.subr.mxu0 0.0
    %241 = vmatpush1.msra.mxu0 0.0
    %242 = vmatprep.subr.mxu0 0.0
    %243 = vmatpush1.msra.mxu0 0.0
    %244 = vmatprep.subr.mxu0 0.0
    %245 = vmatpush1.msra.mxu0 0.0
    %246 = vmatprep.subr.mxu0 0.0
    %247 = vmatpush1.msra.mxu0 0.0
    %248 = vmatprep.subr.mxu0 0.0
    %249 = vmatpush1.msra.mxu0 0.0
    %250 = vmatprep.subr.mxu0 0.0
    %251 = vmatpush1.msra.mxu0 0.0
    %252 = vmatprep.subr.mxu0 0.0
    %253 = vmatpush1.msra.mxu0 0.0
    %254 = vmatprep.subr.mxu0 0.0
    %255 = vmatpush1.msra.mxu0 0.0
    %256 = vmatprep.mubr.f32.mxu0 0.0
    %257 = vmatmul.mubr.f32.gmra.mrb[0].mxu0 %v29
    %v258 = vpop.f32.mrb[0].mxu0
    %v259 = vadd.f32 0.0, %v258
    %v260 = vpop.f32.mrb[0].mxu0
    %261 = vmatprep.mubr.f32.mxu0 0.0
    %262 = vmatmul.mubr.f32.gmra.mrb[0].mxu0 %v32
    %v263 = vpop.f32.mrb[0].mxu0
    %v264 = vadd.f32 0.0, %v263
    %v265 = vpop.f32.mrb[0].mxu0
    %266 = vdwg.mxu0
    %vm267 = vcmask 130048
    %v269 = vsel %vm267, %v101, 0
    %v272 = vsel %vm267, %v106, 0
    %v275 = vsel %vm267, %v180, 0
    %v278 = vsel %vm267, %v185, 0
    %280 = vmatprep.subr.mxu0 0.0
    %281 = vmatpush1.xpose.msra.mxu0 %v275
    %282 = vmatprep.subr.mxu0 0.0
    %283 = vmatpush1.xpose.msra.mxu0 %v278
    %284 = vmatprep.subr.mxu0 0.0
    %285 = vmatpush1.xpose.msra.mxu0 0.0
    %286 = vmatprep.subr.mxu0 0.0
    %287 = vmatpush1.xpose.msra.mxu0 0.0
    %288 = vmatprep.subr.mxu0 0.0
    %289 = vmatpush1.xpose.msra.mxu0 0.0
    %290 = vmatprep.subr.mxu0 0.0
    %291 = vmatpush1.xpose.msra.mxu0 0.0
    %292 = vmatprep.subr.mxu0 0.0
    %293 = vmatpush1.xpose.msra.mxu0 0.0
    %294 = vmatprep.subr.mxu0 0.0
    %295 = vmatpush1.xpose.msra.mxu0 0.0
    %296 = vmatprep.subr.mxu0 0.0
    %297 = vmatpush1.xpose.msra.mxu0 0.0
    %298 = vmatprep.subr.mxu0 0.0
    %299 = vmatpush1.xpose.msra.mxu0 0.0
    %300 = vmatprep.subr.mxu0 0.0
    %301 = vmatpush1.xpose.msra.mxu0 0.0
    %302 = vmatprep.subr.mxu0 0.0
    %303 = vmatpush1.xpose.msra.mxu0 0.0
    %304 = vmatprep.subr.mxu0 0.0
    %305 = vmatpush1.xpose.msra.mxu0 0.0
    %306 = vmatprep.subr.mxu0 0.0
    %307 = vmatpush1.xpose.msra.mxu0 0.0
    %308 = vmatprep.subr.mxu0 0.0
    %309 = vmatpush1.xpose.msra.mxu0 0.0
    %310 = vmatprep.subr.mxu0 0.0
    %311 = vmatpush1.xpose.msra.mxu0 0.0
    %312 = vmatprep.subr.mxu0 0.0
    %313 = vmatpush1.xpose.msra.mxu0 0.0
    %314 = vmatprep.subr.mxu0 0.0
    %315 = vmatpush1.xpose.msra.mxu0 0.0
    %316 = vmatprep.subr.mxu0 0.0
    %317 = vmatpush1.xpose.msra.mxu0 0.0
    %318 = vmatprep.subr.mxu0 0.0
    %319 = vmatpush1.xpose.msra.mxu0 0.0
    %320 = vmatprep.subr.mxu0 0.0
    %321 = vmatpush1.xpose.msra.mxu0 0.0
    %322 = vmatprep.subr.mxu0 0.0
    %323 = vmatpush1.xpose.msra.mxu0 0.0
    %324 = vmatprep.subr.mxu0 0.0
    %325 = vmatpush1.xpose.msra.mxu0 0.0
    %326 = vmatprep.subr.mxu0 0.0
    %327 = vmatpush1.xpose.msra.mxu0 0.0
    %328 = vmatprep.subr.mxu0 0.0
    %329 = vmatpush1.xpose.msra.mxu0 0.0
    %330 = vmatprep.subr.mxu0 0.0
    %331 = vmatpush1.xpose.msra.mxu0 0.0
    %332 = vmatprep.subr.mxu0 0.0
    %333 = vmatpush1.xpose.msra.mxu0 0.0
    %334 = vmatprep.subr.mxu0 0.0
    %335 = vmatpush1.xpose.msra.mxu0 0.0
    %336 = vmatprep.subr.mxu0 0.0
    %337 = vmatpush1.xpose.msra.mxu0 0.0
    %338 = vmatprep.subr.mxu0 0.0
    %339 = vmatpush1.xpose.msra.mxu0 0.0
    %340 = vmatprep.subr.mxu0 0.0
    %341 = vmatpush1.xpose.msra.mxu0 0.0
    %342 = vmatprep.subr.mxu0 0.0
    %343 = vmatpush1.xpose.msra.mxu0 0.0
    %344 = vmatprep.mubr.f32.mxu0 0.0
    %345 = vmatmul.mubr.f32.gmra.mrb[0].mxu0 %v269
    %v346 = vpop.f32.mrb[0].mxu0
    %v347 = vadd.f32 0.0, %v346
    %v348 = vpop.f32.mrb[0].mxu0
    %349 = vmatprep.mubr.f32.mxu0 0.0
    %350 = vmatmul.mubr.f32.gmra.mrb[0].mxu0 %v272
    %v351 = vpop.f32.mrb[0].mxu0
    %v352 = vadd.f32 0.0, %v351
    %v353 = vpop.f32.mrb[0].mxu0
    %354 = vdwg.mxu0
    %v355 = vmul.f32 %v347, 0.25
    %v356 = vmul.f32 %v352, 0.25
    %v357 = vld [vmem:[%s4] sm:$0xff]
    %v358 = vld [vmem:[%s4 + $0x8] sm:$0xff]
    %v359 = vadd.f32 %v355, %v357
    %v360 = vadd.f32 %v356, %v358
    %v361 = vsel %vm267, %v359, -inf
    %362 = vmax.xlane.f32.xlu0 %v361
    %v363 = vpop.xlane.xlu0 %362
    %v364 = vsel %vm267, %v360, -inf
    %365 = vmax.xlane.f32.xlu0 %v364
    %v366 = vpop.xlane.xlu0 %365
    %v367 = vsub.f32 %v359, %v363
    %v368 = vsub.f32 %v360, %v366
    %v369 = vmul.f32 %v367, 1.442695
    %v370 = vpow.pop %v369
    %v371 = vmul.f32 %v368, 1.442695
    %v372 = vpow.pop %v371
    %v373 = vsel %vm267, %v370, 0.0
    %374 = vadd.xlane.f32.xlu0 %v373
    %v375 = vpop.xlane.xlu0 %374
    %v376 = vsel %vm267, %v372, 0.0
    %377 = vadd.xlane.f32.xlu0 %v376
    %v378 = vpop.xlane.xlu0 %377
    %v379 = vrcp.pop %v375
    %v380 = vrcp.pop %v378
    %v381 = vmul.f32 %v375, %v379
    %v382 = vmul.f32 %v378, %v380
    %v383 = vsub.f32 2.0, %v381
    %v384 = vsub.f32 2.0, %v382
    %v385 = vmul.f32 %v379, %v383
    %v386 = vmul.f32 %v380, %v384
    %v387 = vmul.f32 %v370, %v385
    %v388 = vmul.f32 %v372, %v386
    %v390 = vsel %vm267, %v387, 0
    %v393 = vsel %vm267, %v388, 0
    %395 = vmatprep.subr.mxu0 0.0
    %396 = vmatpush1.msra.mxu0 %v259
    %397 = vmatprep.subr.mxu0 0.0
    %398 = vmatpush1.msra.mxu0 %v264
    %399 = vmatprep.subr.mxu0 0.0
    %400 = vmatpush1.msra.mxu0 0.0
    %401 = vmatprep.subr.mxu0 0.0
    %402 = vmatpush1.msra.mxu0 0.0
    %403 = vmatprep.subr.mxu0 0.0
    %404 = vmatpush1.msra.mxu0 0.0
    %405 = vmatprep.subr.mxu0 0.0
    %406 = vmatpush1.msra.mxu0 0.0
    %407 = vmatprep.subr.mxu0 0.0
    %408 = vmatpush1.msra.mxu0 0.0
    %409 = vmatprep.subr.mxu0 0.0
    %410 = vmatpush1.msra.mxu0 0.0
    %411 = vmatprep.subr.mxu0 0.0
    %412 = vmatpush1.msra.mxu0 0.0
    %413 = vmatprep.subr.mxu0 0.0
    %414 = vmatpush1.msra.mxu0 0.0
    %415 = vmatprep.subr.mxu0 0.0
    %416 = vmatpush1.msra.mxu0 0.0
    %417 = vmatprep.subr.mxu0 0.0
    %418 = vmatpush1.msra.mxu0 0.0
    %419 = vmatprep.subr.mxu0 0.0
    %420 = vmatpush1.msra.mxu0 0.0
    %421 = vmatprep.subr.mxu0 0.0
    %422 = vmatpush1.msra.mxu0 0.0
    %423 = vmatprep.subr.mxu0 0.0
    %424 = vmatpush1.msra.mxu0 0.0
    %425 = vmatprep.subr.mxu0 0.0
    %426 = vmatpush1.msra.mxu0 0.0
    %427 = vmatprep.subr.mxu0 0.0
    %428 = vmatpush1.msra.mxu0 0.0
    %429 = vmatprep.subr.mxu0 0.0
    %430 = vmatpush1.msra.mxu0 0.0
    %431 = vmatprep.subr.mxu0 0.0
    %432 = vmatpush1.msra.mxu0 0.0
    %433 = vmatprep.subr.mxu0 0.0
    %434 = vmatpush1.msra.mxu0 0.0
    %435 = vmatprep.subr.mxu0 0.0
    %436 = vmatpush1.msra.mxu0 0.0
    %437 = vmatprep.subr.mxu0 0.0
    %438 = vmatpush1.msra.mxu0 0.0
    %439 = vmatprep.subr.mxu0 0.0
    %440 = vmatpush1.msra.mxu0 0.0
    %441 = vmatprep.subr.mxu0 0.0
    %442 = vmatpush1.msra.mxu0 0.0
    %443 = vmatprep.subr.mxu0 0.0
    %444 = vmatpush1.msra.mxu0 0.0
    %445 = vmatprep.subr.mxu0 0.0
    %446 = vmatpush1.msra.mxu0 0.0
    %447 = vmatprep.subr.mxu0 0.0
    %448 = vmatpush1.msra.mxu0 0.0
    %449 = vmatprep.subr.mxu0 0.0
    %450 = vmatpush1.msra.mxu0 0.0
    %451 = vmatprep.subr.mxu0 0.0
    %452 = vmatpush1.msra.mxu0 0.0
    %453 = vmatprep.subr.mxu0 0.0
    %454 = vmatpush1.msra.mxu0 0.0
    %455 = vmatprep.subr.mxu0 0.0
    %456 = vmatpush1.msra.mxu0 0.0
    %457 = vmatprep.subr.mxu0 0.0
    %458 = vmatpush1.msra.mxu0 0.0
    %459 = vmatprep.mubr.f32.mxu0 0.0
    %460 = vmatmul.mubr.f32.gmra.mrb[0].mxu0 %v390
    %v461 = vpop.f32.mrb[0].mxu0
    %v462 = vadd.f32 0.0, %v461
    %v463 = vpop.f32.mrb[0].mxu0
    %464 = vmatprep.mubr.f32.mxu0 0.0
    %465 = vmatmul.mubr.f32.gmra.mrb[0].mxu0 %v393
    %v466 = vpop.f32.mrb[0].mxu0
    %v467 = vadd.f32 0.0, %v466
    %v468 = vpop.f32.mrb[0].mxu0
    %469 = vdwg.mxu0
    %470 = vst.msk [vmem:[#allocation2] sm:$0xff] %vm267, %v462
    %471 = vst.msk [vmem:[#allocation2 + $0x8] sm:$0xff] %vm267, %v467
    // Predicated region
    $region22: #{_head_call.1} parent=1 // pred_check
      _
    $region23: #{_head_call.1} parent=1 // pred_check_branch
      %473 = sbr.rel (0) target = $region25
    $region24: #{_head_call.1} parent=1 // pred_region
      %s475 = ssub.s32 256, 256
      %476 = vsyncadd [#allocation3], %s475
      %s477 = sshll.u32 [#allocation2], 4
      %s478 = int_to_ptr.vmem [resolvable:$true] %s477
      %483 = dma.vmem_to_hbm [thread:$0]  %s478, 256, %s5, [#allocation3], 128, 128, 8
    $region25: #{_head_call.1} parent=1 // pred_fallthru
      _
    // Predicated region
    $region26: #{_head_call.1} parent=1 // pred_check
      _
    $region27: #{_head_call.1} parent=1 // pred_check_branch
      %485 = sbr.rel (0) target = $region29
    $region28: #{_head_call.1} parent=1 // pred_region
      %486 = dma.done [#allocation3], 256
    $region29: #{_head_call.1} parent=1 // pred_fallthru
      _
    %487 = vsyncpa [#allocation3], 1

</llo_original>
